<compile_context>
chip_gen: v7x
topology: tpu7x:2x2x1
jax: 0.10.0
libtpu: 0.0.40
codegen_flags: <defaults>
</compile_context>

<pallas_src>
import jax
import jax.numpy as jnp
from jax.experimental import pallas as pl
from jax.experimental.pallas import tpu as pltpu


def linear_block_kernel(x_ref, w1_ref, w2_ref, shift_ref, out_ref):
    # x_ref:    (TM, C) f32 activation tile
    # w*_ref:   (C, C)  bf16 weights with BN scale pre-folded (layout: C_in x C_out)
    # shift_ref:(2, C)  f32 folded conv-bias + BN shift for branch 1 / branch 2
    # out_ref:  (TM, C) f32 residual output
    x = x_ref[...]                                               # (TM, C) f32

    # ---- branch 1: 1x1 conv (+ folded BN) + LeakyReLU(0.2)
    y = jnp.dot(x.astype(w1_ref.dtype), w1_ref[...],
                preferred_element_type=jnp.float32)
    y = y + shift_ref[0:1, :]
    y = jnp.where(y >= 0, y, 0.2 * y)

    # ---- branch 2: 1x1 conv (+ folded BN) + LeakyReLU(0.2)
    y = jnp.dot(y.astype(w2_ref.dtype), w2_ref[...],
                preferred_element_type=jnp.float32)
    y = y + shift_ref[1:2, :]
    y = jnp.where(y >= 0, y, 0.2 * y)

    # ---- residual (f32)
    out_ref[...] = (x + y).astype(out_ref.dtype)


def _round_up(a, m):
    return (a + m - 1) // m * m


def linear_block(x_ncl, params, *, tm=1024, eps=1e-5,
                 matmul_dtype=jnp.bfloat16):
    """x_ncl: (N, C, L) float32. Returns (N, C, L). Eval-mode forward."""
    N, C, L = x_ncl.shape
    M = N * L

    # NCL -> (N*L, C): channels on the lane dim (lane-dense, unmasked stores).
    x2d = jnp.transpose(x_ncl, (0, 2, 1)).reshape(M, C)

    # Fold conv bias + eval-mode BN into the weights (one-time host transform):
    #   BN(x @ W.T + b) = x @ (W.T * scale) + ((b - mean) * scale + beta)
    def fold(w, b, gamma, beta, mean, var):
        scale = gamma / jnp.sqrt(var + eps)
        w_eff = (w.T * scale[None, :]).astype(matmul_dtype)      # (C_in, C_out)
        shift = (b - mean) * scale + beta                        # (C,)
        return w_eff, shift

    w1_eff, shift1 = fold(params["w1"], params["b1"],
                          params["bn1_gamma"], params["bn1_beta"],
                          params["bn1_mean"], params["bn1_var"])
    w2_eff, shift2 = fold(params["w2"], params["b2"],
                          params["bn2_gamma"], params["bn2_beta"],
                          params["bn2_mean"], params["bn2_var"])
    shifts = jnp.stack([shift1, shift2]).astype(jnp.float32)     # (2, C)

    # Choose the M tile: large (default 1024) for throughput, but capped to the
    # (row-padded) problem size so tiny inputs don't over-pad.  Pad the last
    # tile instead of asserting divisibility; padded rows are discarded below.
    tm_eff = max(8, _round_up(min(tm, _round_up(M, 128)), 8))
    M_pad = _round_up(M, tm_eff)
    if M_pad != M:
        x2d = jnp.pad(x2d, ((0, M_pad - M), (0, 0)))

    grid = (M_pad // tm_eff,)

    row = pl.BlockSpec((tm_eff, C), lambda i: (i, 0))
    mat = pl.BlockSpec((C, C), lambda i: (0, 0))
    vec = pl.BlockSpec((2, C), lambda i: (0, 0))

    out2d = pl.pallas_call(
        linear_block_kernel,
        out_shape=jax.ShapeDtypeStruct((M_pad, C), x_ncl.dtype),
        grid_spec=pltpu.PrefetchScalarGridSpec(
            num_scalar_prefetch=0,
            grid=grid,
            in_specs=[row, mat, mat, vec],
            out_specs=row,
        ),
        compiler_params=pltpu.CompilerParams(
            dimension_semantics=("parallel",),
            # tm=1024, C=128, f32 tiles: ~0.5 MiB each, double-buffered in+out
            # ~2 MiB + 2x64 KiB bf16 weights — well under this limit, and the
            # explicit cap keeps v7x (64 MiB physical VMEM) safe.
            vmem_limit_bytes=32 * 1024 * 1024,
        ),
    )(x2d, w1_eff, w2_eff, shifts)

    out2d = out2d[:M]
    # (N*L, C) -> NCL
    return jnp.transpose(out2d.reshape(N, L, C), (0, 2, 1))


def reference(x_ncl, params, eps=1e-5):
    """Pure-JAX f32 eval-mode reference for verification."""
    N, C, L = x_ncl.shape
    x = jnp.transpose(x_ncl, (0, 2, 1)).reshape(N * L, C)

    def bn(y, g, b, m, v):
        return (y - m) / jnp.sqrt(v + eps) * g + b

    y = x @ params["w1"].T + params["b1"]
    y = bn(y, params["bn1_gamma"], params["bn1_beta"],
           params["bn1_mean"], params["bn1_var"])
    y = jnp.where(y >= 0, y, 0.2 * y)
    y = y @ params["w2"].T + params["b2"]
    y = bn(y, params["bn2_gamma"], params["bn2_beta"],
           params["bn2_mean"], params["bn2_var"])
    y = jnp.where(y >= 0, y, 0.2 * y)
    out = x + y
    return jnp.transpose(out.reshape(N, L, C), (0, 2, 1))


def make_params(key, C):
    ks = jax.random.split(key, 8)
    return {
        "w1": jax.random.normal(ks[0], (C, C), jnp.float32) * 0.05,  # Conv1d(C,C,1) weight (squeezed)
        "b1": jax.random.normal(ks[1], (C,), jnp.float32) * 0.05,
        "w2": jax.random.normal(ks[2], (C, C), jnp.float32) * 0.05,
        "b2": jax.random.normal(ks[3], (C,), jnp.float32) * 0.05,
        "bn1_gamma": 1.0 + 0.1 * jax.random.normal(ks[4], (C,), jnp.float32),
        "bn1_beta": 0.1 * jax.random.normal(ks[5], (C,), jnp.float32),
        "bn1_mean": 0.05 * jax.random.normal(ks[6], (C,), jnp.float32),
        "bn1_var": jnp.abs(1.0 + 0.1 * jax.random.normal(ks[7], (C,), jnp.float32)),
        "bn2_gamma": 1.0 + 0.05 * jax.random.normal(ks[4], (C,), jnp.float32),
        "bn2_beta": 0.05 * jax.random.normal(ks[5], (C,), jnp.float32),
        "bn2_mean": 0.025 * jax.random.normal(ks[6], (C,), jnp.float32),
        "bn2_var": jnp.abs(1.0 + 0.05 * jax.random.normal(ks[7], (C,), jnp.float32)),
    }


if __name__ == "__main__":
    key = jax.random.PRNGKey(0)
    k_x, k_p = jax.random.split(key)

    N, C, L = 2, 128, 8            # linear_size = 128, seq length = 8
    x = jax.random.normal(k_x, (N, C, L), jnp.float32)
    params = make_params(k_p, C)

    out = linear_block(x, params)
    out = jax.block_until_ready(out)

    ref = reference(x, params)
    assert out.shape == (N, C, L)
    # bf16 MXU inputs with f32 accumulation: tolerance loosened accordingly.
    assert jnp.allclose(out, ref, atol=3e-2, rtol=3e-2), (
        float(jnp.max(jnp.abs(out - ref))))

    print("KERNEL_OK")
</pallas_src>

<mosaic_0001>
module attributes {stable_mosaic.version = 11 : i64} {
  func.func @linear_block_kernel(%arg0: i32, %arg1: memref<128x128xf32, #tpu.memory_space<vmem>>, %arg2: memref<128x128xbf16, #tpu.memory_space<vmem>>, %arg3: memref<128x128xbf16, #tpu.memory_space<vmem>>, %arg4: memref<2x128xf32, #tpu.memory_space<vmem>>, %arg5: memref<128x128xf32, #tpu.memory_space<vmem>>) attributes {dimension_semantics = [#tpu.dimension_semantics<parallel>], iteration_bounds = array<i64: 1>, scalar_prefetch = 0 : i64, scratch_operands = 0 : i64, tpu.core_type = #tpu.core_type<tc>, window_params = [{transform_indices = @transform_0, window_bounds = array<i64: 128, 128>}, {pipeline_mode = #tpu.pipeline_mode<synchronous>, transform_indices = @transform_1, window_bounds = array<i64: 128, 128>}, {pipeline_mode = #tpu.pipeline_mode<synchronous>, transform_indices = @transform_2, window_bounds = array<i64: 128, 128>}, {pipeline_mode = #tpu.pipeline_mode<synchronous>, transform_indices = @transform_3, window_bounds = array<i64: 2, 128>}, {transform_indices = @transform_4, window_bounds = array<i64: 128, 128>}]} {
    %c0 = arith.constant 0 : index
    %c0_0 = arith.constant 0 : index
    %0 = vector.load %arg1[%c0, %c0_0] : memref<128x128xf32, #tpu.memory_space<vmem>>, vector<128x128xf32>
    %1 = arith.truncf %0 : vector<128x128xf32> to vector<128x128xbf16>
    %c0_1 = arith.constant 0 : index
    %c0_2 = arith.constant 0 : index
    %2 = vector.load %arg2[%c0_1, %c0_2] : memref<128x128xbf16, #tpu.memory_space<vmem>>, vector<128x128xbf16>
    %cst = arith.constant dense<0.000000e+00> : vector<128x128xf32>
    %3 = tpu.matmul %1, %2, %cst {dimension_numbers = #tpu.dot_dimension_numbers<[1], [0], [0], [1], [0, 0, 1, 1], [], []>} : vector<128x128xbf16>, vector<128x128xbf16>, vector<128x128xf32> -> vector<128x128xf32>
    %c0_3 = arith.constant 0 : index
    %c0_4 = arith.constant 0 : index
    %4 = vector.load %arg4[%c0_3, %c0_4] : memref<2x128xf32, #tpu.memory_space<vmem>>, vector<1x128xf32>
    %5 = vector.broadcast %4 : vector<1x128xf32> to vector<128x128xf32>
    %6 = arith.addf %3, %5 : vector<128x128xf32>
    %cst_5 = arith.constant 0.000000e+00 : f32
    %7 = vector.broadcast %cst_5 : f32 to vector<128x128xf32>
    %8 = arith.cmpf oge, %6, %7 : vector<128x128xf32>
    %cst_6 = arith.constant 2.000000e-01 : f32
    %9 = vector.broadcast %cst_6 : f32 to vector<128x128xf32>
    %10 = arith.mulf %9, %6 : vector<128x128xf32>
    %11 = arith.select %8, %6, %10 : vector<128x128xi1>, vector<128x128xf32>
    %12 = arith.truncf %11 : vector<128x128xf32> to vector<128x128xbf16>
    %c0_7 = arith.constant 0 : index
    %c0_8 = arith.constant 0 : index
    %13 = vector.load %arg3[%c0_7, %c0_8] : memref<128x128xbf16, #tpu.memory_space<vmem>>, vector<128x128xbf16>
    %cst_9 = arith.constant dense<0.000000e+00> : vector<128x128xf32>
    %14 = tpu.matmul %12, %13, %cst_9 {dimension_numbers = #tpu.dot_dimension_numbers<[1], [0], [0], [1], [0, 0, 1, 1], [], []>} : vector<128x128xbf16>, vector<128x128xbf16>, vector<128x128xf32> -> vector<128x128xf32>
    %c1 = arith.constant 1 : index
    %c0_10 = arith.constant 0 : index
    %15 = vector.load %arg4[%c1, %c0_10] : memref<2x128xf32, #tpu.memory_space<vmem>>, vector<1x128xf32>
    %16 = vector.broadcast %15 : vector<1x128xf32> to vector<128x128xf32>
    %17 = arith.addf %14, %16 : vector<128x128xf32>
    %cst_11 = arith.constant 0.000000e+00 : f32
    %18 = vector.broadcast %cst_11 : f32 to vector<128x128xf32>
    %19 = arith.cmpf oge, %17, %18 : vector<128x128xf32>
    %cst_12 = arith.constant 2.000000e-01 : f32
    %20 = vector.broadcast %cst_12 : f32 to vector<128x128xf32>
    %21 = arith.mulf %20, %17 : vector<128x128xf32>
    %22 = arith.select %19, %17, %21 : vector<128x128xi1>, vector<128x128xf32>
    %23 = arith.addf %0, %22 : vector<128x128xf32>
    %c0_13 = arith.constant 0 : index
    %c0_14 = arith.constant 0 : index
    %24 = vector.load %arg5[%c0_13, %c0_14] : memref<128x128xf32, #tpu.memory_space<vmem>>, vector<128x128xf32>
    tpu.vector_store %arg5[%c0_13, %c0_14], %23 {strides = array<i32>} : memref<128x128xf32, #tpu.memory_space<vmem>>, vector<128x128xf32>,
    return
  }
  func.func @transform_0(%arg0: i32) -> (i32, i32) {
    %c0_i32 = arith.constant 0 : i32
    %c0_i32_0 = arith.constant 0 : i32
    return %arg0, %c0_i32 : i32, i32
  }
  func.func @transform_1(%arg0: i32) -> (i32, i32) {
    %c0_i32 = arith.constant 0 : i32
    %c0_i32_0 = arith.constant 0 : i32
    %c0_i32_1 = arith.constant 0 : i32
    return %c0_i32, %c0_i32_0 : i32, i32
  }
  func.func @transform_2(%arg0: i32) -> (i32, i32) {
    %c0_i32 = arith.constant 0 : i32
    %c0_i32_0 = arith.constant 0 : i32
    %c0_i32_1 = arith.constant 0 : i32
    return %c0_i32, %c0_i32_0 : i32, i32
  }
  func.func @transform_3(%arg0: i32) -> (i32, i32) {
    %c0_i32 = arith.constant 0 : i32
    %c0_i32_0 = arith.constant 0 : i32
    %c0_i32_1 = arith.constant 0 : i32
    return %c0_i32, %c0_i32_0 : i32, i32
  }
  func.func @transform_4(%arg0: i32) -> (i32, i32) {
    %c0_i32 = arith.constant 0 : i32
    %c0_i32_0 = arith.constant 0 : i32
    return %arg0, %c0_i32 : i32, i32
  }
}

</mosaic_0001>

<llo_original>
// kernel: tpu_custom_call.1
$region0: #{tpu_custom_call.1}
  #allocation0 [shape = 'u32[]', space=smem, size = 0x4, offset = 0x4, fixed_abs, tag = 'smem constant byte address 0x4 - core index']
  #allocation1 [shape = 'u32[144,128]{1,0:T(1,128)}', space=vmem, size = 0x12000, scoped, tag = 'internal scratch']
  %s0 = inlined_call_operand.hbm [shape: f32[128,128], index: 0, kind: input, shape index: {}]
  %s1 = inlined_call_operand.hbm [shape: bf16[128,128], index: 1, kind: input, shape index: {}]
  %s2 = inlined_call_operand.hbm [shape: bf16[128,128], index: 2, kind: input, shape index: {}]
  %s3 = inlined_call_operand.vmem [shape: f32[2,128], index: 3, kind: input, shape index: {}]
  %s4 = inlined_call_operand.hbm [shape: f32[128,128], index: 4, kind: output, shape index: {}]
  %s5 = sld [smem:[#allocation0]]
  $region38: #{tpu_custom_call.1} parent=0
    _
  %s7 = ssub.s32 1, %s5
  %s8 = scalar_select 0, %s7, %s5
  $region1: #{tpu_custom_call.1} parent=0
    #allocation2 [shape = 'u8[65536]{0}', space=vmem, size = 0x10000, scoped, tag = 'input window, operand 0, single buffered']
    #allocation3 [shape = 's32[1]{0}', space=sflag, size = 0x4, scoped, tag = 'scoped memory for tpu_custom_call.1']
    #allocation4 [shape = 's32[1]{0}', space=sflag, size = 0x4, scoped, tag = 'scoped memory for tpu_custom_call.1']
    #allocation5 [shape = 'u8[32768]{0}', space=vmem, size = 0x8000, scoped, tag = 'input window, operand 1, single buffered']
    #allocation6 [shape = 's32[1]{0}', space=sflag, size = 0x4, scoped, tag = 'scoped memory for tpu_custom_call.1']
    #allocation7 [shape = 'u8[32768]{0}', space=vmem, size = 0x8000, scoped, tag = 'input window, operand 2, single buffered']
    #allocation8 [shape = 'u8[65536]{0}', space=vmem, size = 0x10000, scoped, tag = 'output window, operand 0, single buffered']
    %9 = vsyncpa [#allocation3], 0
    %10 = vsyncpa [#allocation6], 0
    %11 = vsyncpa [#allocation4], 0
    // Predicated region
    $region2: #{tpu_custom_call.1} parent=1 // pred_check
      _
    $region3: #{tpu_custom_call.1} parent=1 // pred_check_branch
      %13 = sbr.rel (0) target = $region5
    $region4: #{tpu_custom_call.1} parent=1 // pred_region
      %s15 = ssub.s32 2048, 2048
      %16 = vsyncadd [#allocation3], %s15
      %s17 = sshll.u32 [#allocation2], 4
      %s18 = int_to_ptr.vmem [resolvable:$true] %s17
      %23 = dma.hbm_to_vmem [thread:$0]  %s0, 2048, %s18, [#allocation3], 128, 128, 8
    $region5: #{tpu_custom_call.1} parent=1 // pred_fallthru
      _
    // Predicated region
    $region6: #{tpu_custom_call.1} parent=1 // pred_check
      _
    $region7: #{tpu_custom_call.1} parent=1 // pred_check_branch
      %25 = sbr.rel (0) target = $region9
    $region8: #{tpu_custom_call.1} parent=1 // pred_region
      %s27 = ssub.s32 1024, 1024
      %28 = vsyncadd [#allocation6], %s27
      %s29 = sshll.u32 [#allocation5], 4
      %s30 = int_to_ptr.vmem [resolvable:$true] %s29
      %35 = dma.hbm_to_vmem [thread:$0]  %s1, 1024, %s30, [#allocation6], 64, 64, 4
    $region9: #{tpu_custom_call.1} parent=1 // pred_fallthru
      _
    // Predicated region
    $region10: #{tpu_custom_call.1} parent=1 // pred_check
      _
    $region11: #{tpu_custom_call.1} parent=1 // pred_check_branch
      %37 = sbr.rel (0) target = $region13
    $region12: #{tpu_custom_call.1} parent=1 // pred_region
      %s39 = ssub.s32 1024, 1024
      %40 = vsyncadd [#allocation6], %s39
      %s41 = sshll.u32 [#allocation7], 4
      %s42 = int_to_ptr.vmem [resolvable:$true] %s41
      %47 = dma.hbm_to_vmem [thread:$0]  %s2, 1024, %s42, [#allocation6], 64, 64, 4
    $region13: #{tpu_custom_call.1} parent=1 // pred_fallthru
      _
    // Predicated region
    $region14: #{tpu_custom_call.1} parent=1 // pred_check
      _
    $region15: #{tpu_custom_call.1} parent=1 // pred_check_branch
      %49 = sbr.rel (0) target = $region17
    $region16: #{tpu_custom_call.1} parent=1 // pred_region
      _
    $region17: #{tpu_custom_call.1} parent=1 // pred_fallthru
      _
    // Predicated region
    $region18: #{tpu_custom_call.1} parent=1 // pred_check
      _
    $region19: #{tpu_custom_call.1} parent=1 // pred_check_branch
      %51 = sbr.rel (0) target = $region21
    $region20: #{tpu_custom_call.1} parent=1 // pred_region
      %52 = dma.done [#allocation3], 2048
    $region21: #{tpu_custom_call.1} parent=1 // pred_fallthru
      _
    // Predicated region
    $region22: #{tpu_custom_call.1} parent=1 // pred_check
      _
    $region23: #{tpu_custom_call.1} parent=1 // pred_check_branch
      %54 = sbr.rel (0) target = $region25
    $region24: #{tpu_custom_call.1} parent=1 // pred_region
      %55 = dma.done [#allocation6], 1024
    $region25: #{tpu_custom_call.1} parent=1 // pred_fallthru
      _
    // Predicated region
    $region26: #{tpu_custom_call.1} parent=1 // pred_check
      _
    $region27: #{tpu_custom_call.1} parent=1 // pred_check_branch
      %57 = sbr.rel (0) target = $region29
    $region28: #{tpu_custom_call.1} parent=1 // pred_region
      %58 = dma.done [#allocation6], 1024
    $region29: #{tpu_custom_call.1} parent=1 // pred_fallthru
      _
    %v60 = vld [vmem:[#allocation2] sm:$0xff]
    %v61 = vld [vmem:[#allocation2 + $0x8] sm:$0xff]
    %v62 = vld [vmem:[#allocation2 + $0x10] sm:$0xff]
    %v63 = vld [vmem:[#allocation2 + $0x18] sm:$0xff]
    %v64 = vld [vmem:[#allocation2 + $0x20] sm:$0xff]
    %v65 = vld [vmem:[#allocation2 + $0x28] sm:$0xff]
    %v66 = vld [vmem:[#allocation2 + $0x30] sm:$0xff]
    %v67 = vld [vmem:[#allocation2 + $0x38] sm:$0xff]
    %v68 = vld [vmem:[#allocation2 + $0x40] sm:$0xff]
    %v69 = vld [vmem:[#allocation2 + $0x48] sm:$0xff]
    %v70 = vld [vmem:[#allocation2 + $0x50] sm:$0xff]
    %v71 = vld [vmem:[#allocation2 + $0x58] sm:$0xff]
    %v72 = vld [vmem:[#allocation2 + $0x60] sm:$0xff]
    %v73 = vld [vmem:[#allocation2 + $0x68] sm:$0xff]
    %v74 = vld [vmem:[#allocation2 + $0x70] sm:$0xff]
    %v75 = vld [vmem:[#allocation2 + $0x78] sm:$0xff]
    %v76 = vpack.c.bf16 %v61, %v60
    %v77 = vpack.c.bf16 %v63, %v62
    %v78 = vpack.c.bf16 %v65, %v64
    %v79 = vpack.c.bf16 %v67, %v66
    %v80 = vpack.c.bf16 %v69, %v68
    %v81 = vpack.c.bf16 %v71, %v70
    %v82 = vpack.c.bf16 %v73, %v72
    %v83 = vpack.c.bf16 %v75, %v74
    %v84 = vld [vmem:[#allocation5] sm:$0xf]
    %v85 = vld [vmem:[#allocation5 + $0x4] sm:$0xf]
    %v86 = vld [vmem:[#allocation5 + $0x8] sm:$0xf]
    %v87 = vld [vmem:[#allocation5 + $0xc] sm:$0xf]
    %v88 = vld [vmem:[#allocation5 + $0x10] sm:$0xf]
    %v89 = vld [vmem:[#allocation5 + $0x14] sm:$0xf]
    %v90 = vld [vmem:[#allocation5 + $0x18] sm:$0xf]
    %v91 = vld [vmem:[#allocation5 + $0x1c] sm:$0xf]
    %v92 = vld [vmem:[#allocation5 + $0x20] sm:$0xf]
    %v93 = vld [vmem:[#allocation5 + $0x24] sm:$0xf]
    %v94 = vld [vmem:[#allocation5 + $0x28] sm:$0xf]
    %v95 = vld [vmem:[#allocation5 + $0x2c] sm:$0xf]
    %v96 = vld [vmem:[#allocation5 + $0x30] sm:$0xf]
    %v97 = vld [vmem:[#allocation5 + $0x34] sm:$0xf]
    %v98 = vld [vmem:[#allocation5 + $0x38] sm:$0xf]
    %v99 = vld [vmem:[#allocation5 + $0x3c] sm:$0xf]
    %v100 = vld [vmem:[%s3] sm:$0x1]
    %v101 = vlaneseq
    %v102 = vshrl.u32 %v101, 7
    %v103 = vsub.s32 0, %v102
    %v104 = vrot.slane %v100, %v103
    %v121 = vunpack.c.l.b16 %v84
    %v122 = vunpack.c.l.b16 %v85
    %v123 = vunpack.c.l.b16 %v86
    %v124 = vunpack.c.l.b16 %v87
    %v125 = vunpack.c.l.b16 %v88
    %v126 = vunpack.c.l.b16 %v89
    %v127 = vunpack.c.l.b16 %v90
    %v128 = vunpack.c.l.b16 %v91
    %v129 = vunpack.c.l.b16 %v92
    %v130 = vunpack.c.l.b16 %v93
    %v131 = vunpack.c.l.b16 %v94
    %v132 = vunpack.c.l.b16 %v95
    %v133 = vunpack.c.l.b16 %v96
    %v134 = vunpack.c.l.b16 %v97
    %v135 = vunpack.c.l.b16 %v98
    %v136 = vunpack.c.l.b16 %v99
    %v137 = vpack.c.b16 %v122, %v121
    %v138 = vpack.c.b16 %v124, %v123
    %v139 = vpack.c.b16 %v126, %v125
    %v140 = vpack.c.b16 %v128, %v127
    %v141 = vpack.c.b16 %v130, %v129
    %v142 = vpack.c.b16 %v132, %v131
    %v143 = vpack.c.b16 %v134, %v133
    %v144 = vpack.c.b16 %v136, %v135
    %153 = vmatprep.subr.bf16.mxu0 0
    %154 = vmatpush1.bf16.msra.mxu0 %v137
    %155 = vmatprep.subr.bf16.mxu0 0
    %156 = vmatpush1.bf16.msra.mxu0 %v138
    %157 = vmatprep.subr.bf16.mxu0 0
    %158 = vmatpush1.bf16.msra.mxu0 %v139
    %159 = vmatprep.subr.bf16.mxu0 0
    %160 = vmatpush1.bf16.msra.mxu0 %v140
    %161 = vmatprep.subr.bf16.mxu0 0
    %162 = vmatpush1.bf16.msra.mxu0 %v141
    %163 = vmatprep.subr.bf16.mxu0 0
    %164 = vmatpush1.bf16.msra.mxu0 %v142
    %165 = vmatprep.subr.bf16.mxu0 0
    %166 = vmatpush1.bf16.msra.mxu0 %v143
    %167 = vmatprep.subr.bf16.mxu0 0
    %168 = vmatpush1.bf16.msra.mxu0 %v144
    %169 = vmatprep.subr.bf16.mxu0 0
    %170 = vmatpush1.bf16.msra.mxu0 0
    %171 = vmatprep.subr.bf16.mxu0 0
    %172 = vmatpush1.bf16.msra.mxu0 0
    %173 = vmatprep.subr.bf16.mxu0 0
    %174 = vmatpush1.bf16.msra.mxu0 0
    %175 = vmatprep.subr.bf16.mxu0 0
    %176 = vmatpush1.bf16.msra.mxu0 0
    %177 = vmatprep.subr.bf16.mxu0 0
    %178 = vmatpush1.bf16.msra.mxu0 0
    %179 = vmatprep.subr.bf16.mxu0 0
    %180 = vmatpush1.bf16.msra.mxu0 0
    %181 = vmatprep.subr.bf16.mxu0 0
    %182 = vmatpush1.bf16.msra.mxu0 0
    %183 = vmatprep.subr.bf16.mxu0 0
    %184 = vmatpush1.bf16.msra.mxu0 0
    %185 = vmatprep.mubr.bf16.mxu0 0
    %186 = vmatmul.mubr.bf16.gmra.mrb[0].mxu0 %v76
    %v187 = vpop.f32.mrb[0].mxu0
    %v188 = vadd.f32 %v104, %v187
    %v189 = vpop.f32.mrb[0].mxu0
    %v190 = vpop.f32.mrb[0].mxu0
    %v191 = vadd.f32 %v104, %v190
    %v192 = vpop.f32.mrb[0].mxu0
    %193 = vmatprep.mubr.bf16.mxu0 0
    %194 = vmatmul.mubr.bf16.gmra.mrb[0].mxu0 %v77
    %v195 = vpop.f32.mrb[0].mxu0
    %v196 = vadd.f32 %v104, %v195
    %v197 = vpop.f32.mrb[0].mxu0
    %v198 = vpop.f32.mrb[0].mxu0
    %v199 = vadd.f32 %v104, %v198
    %v200 = vpop.f32.mrb[0].mxu0
    %201 = vmatprep.mubr.bf16.mxu0 0
    %202 = vmatmul.mubr.bf16.gmra.mrb[0].mxu0 %v78
    %v203 = vpop.f32.mrb[0].mxu0
    %v204 = vadd.f32 %v104, %v203
    %v205 = vpop.f32.mrb[0].mxu0
    %v206 = vpop.f32.mrb[0].mxu0
    %v207 = vadd.f32 %v104, %v206
    %v208 = vpop.f32.mrb[0].mxu0
    %209 = vmatprep.mubr.bf16.mxu0 0
    %210 = vmatmul.mubr.bf16.gmra.mrb[0].mxu0 %v79
    %v211 = vpop.f32.mrb[0].mxu0
    %v212 = vadd.f32 %v104, %v211
    %v213 = vpop.f32.mrb[0].mxu0
    %v214 = vpop.f32.mrb[0].mxu0
    %v215 = vadd.f32 %v104, %v214
    %v216 = vpop.f32.mrb[0].mxu0
    %217 = vmatprep.mubr.bf16.mxu0 0
    %218 = vmatmul.mubr.bf16.gmra.mrb[0].mxu0 %v80
    %v219 = vpop.f32.mrb[0].mxu0
    %v220 = vadd.f32 %v104, %v219
    %v221 = vpop.f32.mrb[0].mxu0
    %v222 = vpop.f32.mrb[0].mxu0
    %v223 = vadd.f32 %v104, %v222
    %v224 = vpop.f32.mrb[0].mxu0
    %225 = vmatprep.mubr.bf16.mxu0 0
    %226 = vmatmul.mubr.bf16.gmra.mrb[0].mxu0 %v81
    %v227 = vpop.f32.mrb[0].mxu0
    %v228 = vadd.f32 %v104, %v227
    %v229 = vpop.f32.mrb[0].mxu0
    %v230 = vpop.f32.mrb[0].mxu0
    %v231 = vadd.f32 %v104, %v230
    %v232 = vpop.f32.mrb[0].mxu0
    %233 = vmatprep.mubr.bf16.mxu0 0
    %234 = vmatmul.mubr.bf16.gmra.mrb[0].mxu0 %v82
    %v235 = vpop.f32.mrb[0].mxu0
    %v236 = vadd.f32 %v104, %v235
    %v237 = vpop.f32.mrb[0].mxu0
    %v238 = vpop.f32.mrb[0].mxu0
    %v239 = vadd.f32 %v104, %v238
    %v240 = vpop.f32.mrb[0].mxu0
    %241 = vmatprep.mubr.bf16.mxu0 0
    %242 = vmatmul.mubr.bf16.gmra.mrb[0].mxu0 %v83
    %v243 = vpop.f32.mrb[0].mxu0
    %v244 = vadd.f32 %v104, %v243
    %v245 = vpop.f32.mrb[0].mxu0
    %v246 = vpop.f32.mrb[0].mxu0
    %v247 = vadd.f32 %v104, %v246
    %v248 = vpop.f32.mrb[0].mxu0
    %249 = vdwg.mxu0
    %vm250 = vcmp.ge.f32.partialorder %v188, 0.0
    %vm251 = vcmp.ge.f32.partialorder %v191, 0.0
    %vm252 = vcmp.ge.f32.partialorder %v196, 0.0
    %vm253 = vcmp.ge.f32.partialorder %v199, 0.0
    %vm254 = vcmp.ge.f32.partialorder %v204, 0.0
    %vm255 = vcmp.ge.f32.partialorder %v207, 0.0
    %vm256 = vcmp.ge.f32.partialorder %v212, 0.0
    %vm257 = vcmp.ge.f32.partialorder %v215, 0.0
    %vm258 = vcmp.ge.f32.partialorder %v220, 0.0
    %vm259 = vcmp.ge.f32.partialorder %v223, 0.0
    %vm260 = vcmp.ge.f32.partialorder %v228, 0.0
    %vm261 = vcmp.ge.f32.partialorder %v231, 0.0
    %vm262 = vcmp.ge.f32.partialorder %v236, 0.0
    %vm263 = vcmp.ge.f32.partialorder %v239, 0.0
    %vm264 = vcmp.ge.f32.partialorder %v244, 0.0
    %vm265 = vcmp.ge.f32.partialorder %v247, 0.0
    %v266 = vmul.f32 %v188, 0.2
    %v267 = vmul.f32 %v191, 0.2
    %v268 = vmul.f32 %v196, 0.2
    %v269 = vmul.f32 %v199, 0.2
    %v270 = vmul.f32 %v204, 0.2
    %v271 = vmul.f32 %v207, 0.2
    %v272 = vmul.f32 %v212, 0.2
    %v273 = vmul.f32 %v215, 0.2
    %v274 = vmul.f32 %v220, 0.2
    %v275 = vmul.f32 %v223, 0.2
    %v276 = vmul.f32 %v228, 0.2
    %v277 = vmul.f32 %v231, 0.2
    %v278 = vmul.f32 %v236, 0.2
    %v279 = vmul.f32 %v239, 0.2
    %v280 = vmul.f32 %v244, 0.2
    %v281 = vmul.f32 %v247, 0.2
    %v282 = vsel %vm250, %v188, %v266
    %v283 = vsel %vm251, %v191, %v267
    %v284 = vsel %vm252, %v196, %v268
    %v285 = vsel %vm253, %v199, %v269
    %v286 = vsel %vm254, %v204, %v270
    %v287 = vsel %vm255, %v207, %v271
    %v288 = vsel %vm256, %v212, %v272
    %v289 = vsel %vm257, %v215, %v273
    %v290 = vsel %vm258, %v220, %v274
    %v291 = vsel %vm259, %v223, %v275
    %v292 = vsel %vm260, %v228, %v276
    %v293 = vsel %vm261, %v231, %v277
    %v294 = vsel %vm262, %v236, %v278
    %v295 = vsel %vm263, %v239, %v279
    %v296 = vsel %vm264, %v244, %v280
    %v297 = vsel %vm265, %v247, %v281
    %v298 = vpack.c.bf16 %v283, %v282
    %v299 = vpack.c.bf16 %v285, %v284
    %v300 = vpack.c.bf16 %v287, %v286
    %v301 = vpack.c.bf16 %v289, %v288
    %v302 = vpack.c.bf16 %v291, %v290
    %v303 = vpack.c.bf16 %v293, %v292
    %v304 = vpack.c.bf16 %v295, %v294
    %v305 = vpack.c.bf16 %v297, %v296
    %v306 = vld [vmem:[#allocation7] sm:$0xf]
    %v307 = vld [vmem:[#allocation7 + $0x4] sm:$0xf]
    %v308 = vld [vmem:[#allocation7 + $0x8] sm:$0xf]
    %v309 = vld [vmem:[#allocation7 + $0xc] sm:$0xf]
    %v310 = vld [vmem:[#allocation7 + $0x10] sm:$0xf]
    %v311 = vld [vmem:[#allocation7 + $0x14] sm:$0xf]
    %v312 = vld [vmem:[#allocation7 + $0x18] sm:$0xf]
    %v313 = vld [vmem:[#allocation7 + $0x1c] sm:$0xf]
    %v314 = vld [vmem:[#allocation7 + $0x20] sm:$0xf]
    %v315 = vld [vmem:[#allocation7 + $0x24] sm:$0xf]
    %v316 = vld [vmem:[#allocation7 + $0x28] sm:$0xf]
    %v317 = vld [vmem:[#allocation7 + $0x2c] sm:$0xf]
    %v318 = vld [vmem:[#allocation7 + $0x30] sm:$0xf]
    %v319 = vld [vmem:[#allocation7 + $0x34] sm:$0xf]
    %v320 = vld [vmem:[#allocation7 + $0x38] sm:$0xf]
    %v321 = vld [vmem:[#allocation7 + $0x3c] sm:$0xf]
    %v322 = vld [vmem:[%s3 + $0x1] sm:$0x1]
    %v323 = vlaneseq
    %v324 = vshrl.u32 %v323, 7
    %v325 = vsub.s32 0, %v324
    %v326 = vrot.slane %v322, %v325
    %v343 = vunpack.c.l.b16 %v306
    %v344 = vunpack.c.l.b16 %v307
    %v345 = vunpack.c.l.b16 %v308
    %v346 = vunpack.c.l.b16 %v309
    %v347 = vunpack.c.l.b16 %v310
    %v348 = vunpack.c.l.b16 %v311
    %v349 = vunpack.c.l.b16 %v312
    %v350 = vunpack.c.l.b16 %v313
    %v351 = vunpack.c.l.b16 %v314
    %v352 = vunpack.c.l.b16 %v315
    %v353 = vunpack.c.l.b16 %v316
    %v354 = vunpack.c.l.b16 %v317
    %v355 = vunpack.c.l.b16 %v318
    %v356 = vunpack.c.l.b16 %v319
    %v357 = vunpack.c.l.b16 %v320
    %v358 = vunpack.c.l.b16 %v321
    %v359 = vpack.c.b16 %v344, %v343
    %v360 = vpack.c.b16 %v346, %v345
    %v361 = vpack.c.b16 %v348, %v347
    %v362 = vpack.c.b16 %v350, %v349
    %v363 = vpack.c.b16 %v352, %v351
    %v364 = vpack.c.b16 %v354, %v353
    %v365 = vpack.c.b16 %v356, %v355
    %v366 = vpack.c.b16 %v358, %v357
    %375 = vmatprep.subr.bf16.mxu0 0
    %376 = vmatpush1.bf16.msra.mxu0 %v359
    %377 = vmatprep.subr.bf16.mxu0 0
    %378 = vmatpush1.bf16.msra.mxu0 %v360
    %379 = vmatprep.subr.bf16.mxu0 0
    %380 = vmatpush1.bf16.msra.mxu0 %v361
    %381 = vmatprep.subr.bf16.mxu0 0
    %382 = vmatpush1.bf16.msra.mxu0 %v362
    %383 = vmatprep.subr.bf16.mxu0 0
    %384 = vmatpush1.bf16.msra.mxu0 %v363
    %385 = vmatprep.subr.bf16.mxu0 0
    %386 = vmatpush1.bf16.msra.mxu0 %v364
    %387 = vmatprep.subr.bf16.mxu0 0
    %388 = vmatpush1.bf16.msra.mxu0 %v365
    %389 = vmatprep.subr.bf16.mxu0 0
    %390 = vmatpush1.bf16.msra.mxu0 %v366
    %391 = vmatprep.subr.bf16.mxu0 0
    %392 = vmatpush1.bf16.msra.mxu0 0
    %393 = vmatprep.subr.bf16.mxu0 0
    %394 = vmatpush1.bf16.msra.mxu0 0
    %395 = vmatprep.subr.bf16.mxu0 0
    %396 = vmatpush1.bf16.msra.mxu0 0
    %397 = vmatprep.subr.bf16.mxu0 0
    %398 = vmatpush1.bf16.msra.mxu0 0
    %399 = vmatprep.subr.bf16.mxu0 0
    %400 = vmatpush1.bf16.msra.mxu0 0
    %401 = vmatprep.subr.bf16.mxu0 0
    %402 = vmatpush1.bf16.msra.mxu0 0
    %403 = vmatprep.subr.bf16.mxu0 0
    %404 = vmatpush1.bf16.msra.mxu0 0
    %405 = vmatprep.subr.bf16.mxu0 0
    %406 = vmatpush1.bf16.msra.mxu0 0
    %407 = vmatprep.mubr.bf16.mxu0 0
    %408 = vmatmul.mubr.bf16.gmra.mrb[0].mxu0 %v298
    %v409 = vpop.f32.mrb[0].mxu0
    %v410 = vadd.f32 %v326, %v409
    %v411 = vpop.f32.mrb[0].mxu0
    %v412 = vpop.f32.mrb[0].mxu0
    %v413 = vadd.f32 %v326, %v412
    %v414 = vpop.f32.mrb[0].mxu0
    %415 = vmatprep.mubr.bf16.mxu0 0
    %416 = vmatmul.mubr.bf16.gmra.mrb[0].mxu0 %v299
    %v417 = vpop.f32.mrb[0].mxu0
    %v418 = vadd.f32 %v326, %v417
    %v419 = vpop.f32.mrb[0].mxu0
    %v420 = vpop.f32.mrb[0].mxu0
    %v421 = vadd.f32 %v326, %v420
    %v422 = vpop.f32.mrb[0].mxu0
    %423 = vmatprep.mubr.bf16.mxu0 0
    %424 = vmatmul.mubr.bf16.gmra.mrb[0].mxu0 %v300
    %v425 = vpop.f32.mrb[0].mxu0
    %v426 = vadd.f32 %v326, %v425
    %v427 = vpop.f32.mrb[0].mxu0
    %v428 = vpop.f32.mrb[0].mxu0
    %v429 = vadd.f32 %v326, %v428
    %v430 = vpop.f32.mrb[0].mxu0
    %431 = vmatprep.mubr.bf16.mxu0 0
    %432 = vmatmul.mubr.bf16.gmra.mrb[0].mxu0 %v301
    %v433 = vpop.f32.mrb[0].mxu0
    %v434 = vadd.f32 %v326, %v433
    %v435 = vpop.f32.mrb[0].mxu0
    %v436 = vpop.f32.mrb[0].mxu0
    %v437 = vadd.f32 %v326, %v436
    %v438 = vpop.f32.mrb[0].mxu0
    %439 = vmatprep.mubr.bf16.mxu0 0
    %440 = vmatmul.mubr.bf16.gmra.mrb[0].mxu0 %v302
    %v441 = vpop.f32.mrb[0].mxu0
    %v442 = vadd.f32 %v326, %v441
    %v443 = vpop.f32.mrb[0].mxu0
    %v444 = vpop.f32.mrb[0].mxu0
    %v445 = vadd.f32 %v326, %v444
    %v446 = vpop.f32.mrb[0].mxu0
    %447 = vmatprep.mubr.bf16.mxu0 0
    %448 = vmatmul.mubr.bf16.gmra.mrb[0].mxu0 %v303
    %v449 = vpop.f32.mrb[0].mxu0
    %v450 = vadd.f32 %v326, %v449
    %v451 = vpop.f32.mrb[0].mxu0
    %v452 = vpop.f32.mrb[0].mxu0
    %v453 = vadd.f32 %v326, %v452
    %v454 = vpop.f32.mrb[0].mxu0
    %455 = vmatprep.mubr.bf16.mxu0 0
    %456 = vmatmul.mubr.bf16.gmra.mrb[0].mxu0 %v304
    %v457 = vpop.f32.mrb[0].mxu0
    %v458 = vadd.f32 %v326, %v457
    %v459 = vpop.f32.mrb[0].mxu0
    %v460 = vpop.f32.mrb[0].mxu0
    %v461 = vadd.f32 %v326, %v460
    %v462 = vpop.f32.mrb[0].mxu0
    %463 = vmatprep.mubr.bf16.mxu0 0
    %464 = vmatmul.mubr.bf16.gmra.mrb[0].mxu0 %v305
    %v465 = vpop.f32.mrb[0].mxu0
    %v466 = vadd.f32 %v326, %v465
    %v467 = vpop.f32.mrb[0].mxu0
    %v468 = vpop.f32.mrb[0].mxu0
    %v469 = vadd.f32 %v326, %v468
    %v470 = vpop.f32.mrb[0].mxu0
    %471 = vdwg.mxu0
    %vm472 = vcmp.ge.f32.partialorder %v410, 0.0
    %vm473 = vcmp.ge.f32.partialorder %v413, 0.0
    %vm474 = vcmp.ge.f32.partialorder %v418, 0.0
    %vm475 = vcmp.ge.f32.partialorder %v421, 0.0
    %vm476 = vcmp.ge.f32.partialorder %v426, 0.0
    %vm477 = vcmp.ge.f32.partialorder %v429, 0.0
    %vm478 = vcmp.ge.f32.partialorder %v434, 0.0
    %vm479 = vcmp.ge.f32.partialorder %v437, 0.0
    %vm480 = vcmp.ge.f32.partialorder %v442, 0.0
    %vm481 = vcmp.ge.f32.partialorder %v445, 0.0
    %vm482 = vcmp.ge.f32.partialorder %v450, 0.0
    %vm483 = vcmp.ge.f32.partialorder %v453, 0.0
    %vm484 = vcmp.ge.f32.partialorder %v458, 0.0
    %vm485 = vcmp.ge.f32.partialorder %v461, 0.0
    %vm486 = vcmp.ge.f32.partialorder %v466, 0.0
    %vm487 = vcmp.ge.f32.partialorder %v469, 0.0
    %v488 = vmul.f32 %v410, 0.2
    %v489 = vmul.f32 %v413, 0.2
    %v490 = vmul.f32 %v418, 0.2
    %v491 = vmul.f32 %v421, 0.2
    %v492 = vmul.f32 %v426, 0.2
    %v493 = vmul.f32 %v429, 0.2
    %v494 = vmul.f32 %v434, 0.2
    %v495 = vmul.f32 %v437, 0.2
    %v496 = vmul.f32 %v442, 0.2
    %v497 = vmul.f32 %v445, 0.2
    %v498 = vmul.f32 %v450, 0.2
    %v499 = vmul.f32 %v453, 0.2
    %v500 = vmul.f32 %v458, 0.2
    %v501 = vmul.f32 %v461, 0.2
    %v502 = vmul.f32 %v466, 0.2
    %v503 = vmul.f32 %v469, 0.2
    %v504 = vsel %vm472, %v410, %v488
    %v505 = vsel %vm473, %v413, %v489
    %v506 = vsel %vm474, %v418, %v490
    %v507 = vsel %vm475, %v421, %v491
    %v508 = vsel %vm476, %v426, %v492
    %v509 = vsel %vm477, %v429, %v493
    %v510 = vsel %vm478, %v434, %v494
    %v511 = vsel %vm479, %v437, %v495
    %v512 = vsel %vm480, %v442, %v496
    %v513 = vsel %vm481, %v445, %v497
    %v514 = vsel %vm482, %v450, %v498
    %v515 = vsel %vm483, %v453, %v499
    %v516 = vsel %vm484, %v458, %v500
    %v517 = vsel %vm485, %v461, %v501
    %v518 = vsel %vm486, %v466, %v502
    %v519 = vsel %vm487, %v469, %v503
    %v520 = vadd.f32 %v60, %v504
    %v521 = vadd.f32 %v61, %v505
    %v522 = vadd.f32 %v62, %v506
    %v523 = vadd.f32 %v63, %v507
    %v524 = vadd.f32 %v64, %v508
    %v525 = vadd.f32 %v65, %v509
    %v526 = vadd.f32 %v66, %v510
    %v527 = vadd.f32 %v67, %v511
    %v528 = vadd.f32 %v68, %v512
    %v529 = vadd.f32 %v69, %v513
    %v530 = vadd.f32 %v70, %v514
    %v531 = vadd.f32 %v71, %v515
    %v532 = vadd.f32 %v72, %v516
    %v533 = vadd.f32 %v73, %v517
    %v534 = vadd.f32 %v74, %v518
    %v535 = vadd.f32 %v75, %v519
    %536 = vst [vmem:[#allocation8] sm:$0xff] %v520
    %537 = vst [vmem:[#allocation8 + $0x8] sm:$0xff] %v521
    %538 = vst [vmem:[#allocation8 + $0x10] sm:$0xff] %v522
    %539 = vst [vmem:[#allocation8 + $0x18] sm:$0xff] %v523
    %540 = vst [vmem:[#allocation8 + $0x20] sm:$0xff] %v524
    %541 = vst [vmem:[#allocation8 + $0x28] sm:$0xff] %v525
    %542 = vst [vmem:[#allocation8 + $0x30] sm:$0xff] %v526
    %543 = vst [vmem:[#allocation8 + $0x38] sm:$0xff] %v527
    %544 = vst [vmem:[#allocation8 + $0x40] sm:$0xff] %v528
    %545 = vst [vmem:[#allocation8 + $0x48] sm:$0xff] %v529
    %546 = vst [vmem:[#allocation8 + $0x50] sm:$0xff] %v530
    %547 = vst [vmem:[#allocation8 + $0x58] sm:$0xff] %v531
    %548 = vst [vmem:[#allocation8 + $0x60] sm:$0xff] %v532
    %549 = vst [vmem:[#allocation8 + $0x68] sm:$0xff] %v533
    %550 = vst [vmem:[#allocation8 + $0x70] sm:$0xff] %v534
    %551 = vst [vmem:[#allocation8 + $0x78] sm:$0xff] %v535
    // Predicated region
    $region30: #{tpu_custom_call.1} parent=1 // pred_check
      _
    $region31: #{tpu_custom_call.1} parent=1 // pred_check_branch
      %553 = sbr.rel (0) target = $region33
    $region32: #{tpu_custom_call.1} parent=1 // pred_region
      %s555 = ssub.s32 2048, 2048
      %556 = vsyncadd [#allocation4], %s555
      %s557 = sshll.u32 [#allocation8], 4
      %s558 = int_to_ptr.vmem [resolvable:$true] %s557
      %563 = dma.vmem_to_hbm [thread:$0]  %s558, 2048, %s4, [#allocation4], 128, 128, 8
    $region33: #{tpu_custom_call.1} parent=1 // pred_fallthru
      _
    // Predicated region
    $region34: #{tpu_custom_call.1} parent=1 // pred_check
      _
    $region35: #{tpu_custom_call.1} parent=1 // pred_check_branch
      %565 = sbr.rel (0) target = $region37
    $region36: #{tpu_custom_call.1} parent=1 // pred_region
      %566 = dma.done [#allocation4], 2048
    $region37: #{tpu_custom_call.1} parent=1 // pred_fallthru
      _
    %567 = vsyncpa [#allocation3], 1
    %568 = vsyncpa [#allocation6], 1
    %569 = vsyncpa [#allocation4], 1

</llo_original>
